<compile_context>
chip_gen: v6e
topology: v6e:2x2x1
jax: 0.10.0
libtpu: 0.0.40
codegen_flags: <defaults>
</compile_context>

<pallas_src>
import jax
import jax.numpy as jnp
from jax.experimental import pallas as pl
from jax.experimental.pallas import tpu as pltpu


def _noisy_linear_kernel(x_ref, w_ref, ws_ref, eps_in_ref, eps_out_ref,
                         b_ref, bs_ref, o_ref, acc_w, acc_ws):
    # x_ref:       (tb, tk)   input tile (compute dtype)
    # w_ref:       (tk, tn)   W^T tile
    # ws_ref:      (tk, tn)   W_scale^T tile
    # eps_in_ref:  (1,  tk)   rescaled input noise (compute dtype)
    # eps_out_ref: (1,  tn)   rescaled output noise (f32)
    # b_ref:       (1,  tn)   bias (f32)
    # bs_ref:      (1,  tn)   bias scale (f32)
    # o_ref:       (tb, tn)   output tile
    # acc_w/acc_ws:(tb, tn)   f32 accumulators (plain / noise matmul)
    k = pl.program_id(2)

    @pl.when(k == 0)
    def _():
        acc_w[...] = jnp.zeros_like(acc_w)
        acc_ws[...] = jnp.zeros_like(acc_ws)

    x = x_ref[...]
    # Plain-weight term: x @ W^T
    acc_w[...] += jnp.dot(x, w_ref[...], preferred_element_type=jnp.float32)
    # Factorized noise term: (x * eps_in) @ W_scale^T; the eps_out scaling
    # along the output axis is applied once at finalize time.
    xn = x * eps_in_ref[...]
    acc_ws[...] += jnp.dot(xn, ws_ref[...], preferred_element_type=jnp.float32)

    @pl.when(k == pl.num_programs(2) - 1)
    def _():
        eps_out = eps_out_ref[...]                    # (1, tn) f32
        b_eff = b_ref[...] + bs_ref[...] * eps_out    # (1, tn) f32
        y = acc_w[...] + eps_out * acc_ws[...] + b_eff
        o_ref[...] = y.astype(o_ref.dtype)


def _round_up(x, m):
    return (x + m - 1) // m * m


def noisy_linear(x, weight, weight_scale, eps_out, eps_in, bias, bias_scale,
                 *, tb=128, tn=256, tk=512, compute_dtype=None):
    """y = x @ (W + W_scale * outer(eps_out, eps_in))^T + (b + b_scale * eps_out)."""
    B, n_in = x.shape
    n_out = weight.shape[0]
    out_dtype = x.dtype
    if compute_dtype is None:
        compute_dtype = x.dtype

    # ---- tile sizes (respect the (8, 128) vreg tiling) ----
    tb = min(tb, _round_up(B, 8))
    tn = min(tn, _round_up(n_out, 128))
    tk = min(tk, _round_up(n_in, 128))
    Bp = _round_up(B, tb)
    Np = _round_up(n_out, tn)
    Kp = _round_up(n_in, tk)

    # ---- wrapper-side layout plumbing: zero-pad + transpose + cast ----
    xs = jnp.pad(x, ((0, Bp - B), (0, Kp - n_in))).astype(compute_dtype)
    wT = jnp.pad(weight.T, ((0, Kp - n_in), (0, Np - n_out))).astype(compute_dtype)
    wsT = jnp.pad(weight_scale.T,
                  ((0, Kp - n_in), (0, Np - n_out))).astype(compute_dtype)
    eps_in_r = jnp.pad(eps_in.reshape(1, n_in),
                       ((0, 0), (0, Kp - n_in))).astype(compute_dtype)
    eps_out_r = jnp.pad(eps_out.reshape(1, n_out),
                        ((0, 0), (0, Np - n_out))).astype(jnp.float32)
    bias_r = jnp.pad(bias.reshape(1, n_out),
                     ((0, 0), (0, Np - n_out))).astype(jnp.float32)
    bias_scale_r = jnp.pad(bias_scale.reshape(1, n_out),
                           ((0, 0), (0, Np - n_out))).astype(jnp.float32)

    grid = (Bp // tb, Np // tn, Kp // tk)

    in_bytes = jnp.dtype(compute_dtype).itemsize
    cost = pl.CostEstimate(
        flops=4 * Bp * Kp * Np,          # two matmuls
        transcendentals=0,
        bytes_accessed=(Bp * Kp + 2 * Kp * Np + Kp + 3 * Np) * in_bytes
                       + Bp * Np * jnp.dtype(out_dtype).itemsize,
    )

    out = pl.pallas_call(
        _noisy_linear_kernel,
        out_shape=jax.ShapeDtypeStruct((Bp, Np), out_dtype),
        grid_spec=pltpu.PrefetchScalarGridSpec(
            num_scalar_prefetch=0,
            grid=grid,
            in_specs=[
                pl.BlockSpec((tb, tk), lambda i, j, k: (i, k)),   # x
                pl.BlockSpec((tk, tn), lambda i, j, k: (k, j)),   # W^T
                pl.BlockSpec((tk, tn), lambda i, j, k: (k, j)),   # W_scale^T
                pl.BlockSpec((1, tk), lambda i, j, k: (0, k)),    # eps_in
                pl.BlockSpec((1, tn), lambda i, j, k: (0, j)),    # eps_out
                pl.BlockSpec((1, tn), lambda i, j, k: (0, j)),    # bias
                pl.BlockSpec((1, tn), lambda i, j, k: (0, j)),    # bias_scale
            ],
            out_specs=pl.BlockSpec((tb, tn), lambda i, j, k: (i, j)),
            scratch_shapes=[pltpu.VMEM((tb, tn), jnp.float32),
                            pltpu.VMEM((tb, tn), jnp.float32)],
        ),
        compiler_params=pltpu.CompilerParams(
            dimension_semantics=("parallel", "parallel", "arbitrary")),
        cost_estimate=cost,
    )(xs, wT, wsT, eps_in_r, eps_out_r, bias_r, bias_scale_r)

    return out[:B, :n_out]


def rescale(v):
    # NoisyLinear.rescale: sign(v) * sqrt(|v|)
    return jnp.sign(v) * jnp.sqrt(jnp.abs(v))


def _make_params(key, B, n_input, n_output, init_std=0.1):
    k_x, k_w, k_b, k_ein, k_eout = jax.random.split(key, 5)
    bound = 1.0 / jnp.sqrt(jnp.float32(n_input))
    weight = jax.random.uniform(k_w, (n_output, n_input), jnp.float32,
                                minval=-bound, maxval=bound)
    bias = jax.random.uniform(k_b, (n_output,), jnp.float32,
                              minval=-bound, maxval=bound)
    weight_scale = jnp.full((n_output, n_input),
                            init_std / jnp.sqrt(jnp.float32(n_input)),
                            jnp.float32)
    bias_scale = jnp.full((n_output,),
                          init_std / jnp.sqrt(jnp.float32(n_output)),
                          jnp.float32)
    eps_in = rescale(jax.random.normal(k_ein, (n_input,), jnp.float32))
    eps_out = rescale(jax.random.normal(k_eout, (n_output,), jnp.float32))
    x = jax.random.normal(k_x, (B, n_input), jnp.float32)
    return x, weight, weight_scale, eps_out, eps_in, bias, bias_scale


def _reference(x, weight, weight_scale, eps_out, eps_in, bias, bias_scale):
    w_eff = weight + weight_scale * jnp.outer(eps_out, eps_in)
    b_eff = bias + bias_scale * eps_out
    return x @ w_eff.T + b_eff


if __name__ == "__main__":
    key = jax.random.PRNGKey(0)
    k1, k2 = jax.random.split(key)

    # --- test 1: module-sized shapes, f32 compute, tight tolerance ---
    args = _make_params(k1, B=2, n_input=32, n_output=16)
    out = jax.block_until_ready(noisy_linear(*args))
    ref = _reference(*args)
    assert jnp.allclose(out, ref, atol=1e-5, rtol=1e-5), "f32 mismatch vs reference"

    # --- test 2: multi-tile grid (batch/N/K all tiled), f32 compute ---
    args2 = _make_params(k2, B=5, n_input=300, n_output=200)
    out2 = jax.block_until_ready(
        noisy_linear(*args2, tb=8, tn=128, tk=128))
    ref2 = _reference(*args2)
    assert jnp.allclose(out2, ref2, atol=1e-4, rtol=1e-4), "tiled mismatch vs reference"

    # --- test 3: bf16 operand streaming (f32 accumulation), loose tolerance ---
    out3 = jax.block_until_ready(
        noisy_linear(*args2, tb=8, tn=128, tk=128, compute_dtype=jnp.bfloat16))
    assert jnp.allclose(out3, ref2, atol=1e-1, rtol=1e-1), "bf16 mismatch vs reference"

    print("KERNEL_OK")
</pallas_src>

<mosaic_0001>
module attributes {stable_mosaic.version = 11 : i64} {
  func.func @_noisy_linear_kernel(%arg0: i32, %arg1: i32, %arg2: i32, %arg3: memref<8x128xf32, #tpu.memory_space<vmem>>, %arg4: memref<128x128xf32, #tpu.memory_space<vmem>>, %arg5: memref<128x128xf32, #tpu.memory_space<vmem>>, %arg6: memref<1x128xf32, #tpu.memory_space<vmem>>, %arg7: memref<1x128xf32, #tpu.memory_space<vmem>>, %arg8: memref<1x128xf32, #tpu.memory_space<vmem>>, %arg9: memref<1x128xf32, #tpu.memory_space<vmem>>, %arg10: memref<8x128xf32, #tpu.memory_space<vmem>>, %arg11: memref<8x128xf32, #tpu.memory_space<vmem>>, %arg12: memref<8x128xf32, #tpu.memory_space<vmem>>) attributes {dimension_semantics = [#tpu.dimension_semantics<parallel>, #tpu.dimension_semantics<parallel>, #tpu.dimension_semantics<arbitrary>], iteration_bounds = array<i64: 1, 1, 1>, scalar_prefetch = 0 : i64, scratch_operands = 2 : i64, tpu.core_type = #tpu.core_type<tc>, window_params = [{transform_indices = @transform_0, window_bounds = array<i64: 8, 128>}, {transform_indices = @transform_1, window_bounds = array<i64: 128, 128>}, {transform_indices = @transform_2, window_bounds = array<i64: 128, 128>}, {transform_indices = @transform_3, window_bounds = array<i64: 1, 128>}, {transform_indices = @transform_4, window_bounds = array<i64: 1, 128>}, {transform_indices = @transform_5, window_bounds = array<i64: 1, 128>}, {transform_indices = @transform_6, window_bounds = array<i64: 1, 128>}, {transform_indices = @transform_7, window_bounds = array<i64: 8, 128>}]} {
    %c0_i32 = arith.constant 0 : i32
    %0 = arith.cmpi eq, %arg2, %c0_i32 : i32
    %1 = arith.extui %0 : i1 to i32
    %c0_i32_0 = arith.constant 0 : i32
    %2 = arith.cmpi ne, %1, %c0_i32_0 : i32
    scf.if %2 {
      %cst_19 = arith.constant 0.000000e+00 : f32
      %20 = vector.broadcast %cst_19 : f32 to vector<8x128xf32>
      %c0_20 = arith.constant 0 : index
      %c0_21 = arith.constant 0 : index
      %21 = vector.load %arg11[%c0_20, %c0_21] : memref<8x128xf32, #tpu.memory_space<vmem>>, vector<8x128xf32>
      tpu.vector_store %arg11[%c0_20, %c0_21], %20 {strides = array<i32>} : memref<8x128xf32, #tpu.memory_space<vmem>>, vector<8x128xf32>,
      %cst_22 = arith.constant 0.000000e+00 : f32
      %22 = vector.broadcast %cst_22 : f32 to vector<8x128xf32>
      %c0_23 = arith.constant 0 : index
      %c0_24 = arith.constant 0 : index
      %23 = vector.load %arg12[%c0_23, %c0_24] : memref<8x128xf32, #tpu.memory_space<vmem>>, vector<8x128xf32>
      tpu.vector_store %arg12[%c0_23, %c0_24], %22 {strides = array<i32>} : memref<8x128xf32, #tpu.memory_space<vmem>>, vector<8x128xf32>,
    } else {
    }
    %c0 = arith.constant 0 : index
    %c0_1 = arith.constant 0 : index
    %3 = vector.load %arg3[%c0, %c0_1] : memref<8x128xf32, #tpu.memory_space<vmem>>, vector<8x128xf32>
    %c0_2 = arith.constant 0 : index
    %c0_3 = arith.constant 0 : index
    %4 = vector.load %arg11[%c0_2, %c0_3] : memref<8x128xf32, #tpu.memory_space<vmem>>, vector<8x128xf32>
    %c0_4 = arith.constant 0 : index
    %c0_5 = arith.constant 0 : index
    %5 = vector.load %arg4[%c0_4, %c0_5] : memref<128x128xf32, #tpu.memory_space<vmem>>, vector<128x128xf32>
    %cst = arith.constant dense<0.000000e+00> : vector<8x128xf32>
    %6 = tpu.matmul %3, %5, %cst {dimension_numbers = #tpu.dot_dimension_numbers<[1], [0], [0], [1], [0, 0, 1, 1], [], []>} : vector<8x128xf32>, vector<128x128xf32>, vector<8x128xf32> -> vector<8x128xf32>
    %7 = arith.addf %4, %6 : vector<8x128xf32>
    %c0_6 = arith.constant 0 : index
    %c0_7 = arith.constant 0 : index
    %8 = vector.load %arg11[%c0_6, %c0_7] : memref<8x128xf32, #tpu.memory_space<vmem>>, vector<8x128xf32>
    tpu.vector_store %arg11[%c0_6, %c0_7], %7 {strides = array<i32>} : memref<8x128xf32, #tpu.memory_space<vmem>>, vector<8x128xf32>,
    %c0_8 = arith.constant 0 : index
    %c0_9 = arith.constant 0 : index
    %9 = vector.load %arg6[%c0_8, %c0_9] : memref<1x128xf32, #tpu.memory_space<vmem>>, vector<1x128xf32>
    %10 = vector.broadcast %9 : vector<1x128xf32> to vector<8x128xf32>
    %11 = arith.mulf %3, %10 : vector<8x128xf32>
    %c0_10 = arith.constant 0 : index
    %c0_11 = arith.constant 0 : index
    %12 = vector.load %arg12[%c0_10, %c0_11] : memref<8x128xf32, #tpu.memory_space<vmem>>, vector<8x128xf32>
    %c0_12 = arith.constant 0 : index
    %c0_13 = arith.constant 0 : index
    %13 = vector.load %arg5[%c0_12, %c0_13] : memref<128x128xf32, #tpu.memory_space<vmem>>, vector<128x128xf32>
    %cst_14 = arith.constant dense<0.000000e+00> : vector<8x128xf32>
    %14 = tpu.matmul %11, %13, %cst_14 {dimension_numbers = #tpu.dot_dimension_numbers<[1], [0], [0], [1], [0, 0, 1, 1], [], []>} : vector<8x128xf32>, vector<128x128xf32>, vector<8x128xf32> -> vector<8x128xf32>
    %15 = arith.addf %12, %14 : vector<8x128xf32>
    %c0_15 = arith.constant 0 : index
    %c0_16 = arith.constant 0 : index
    %16 = vector.load %arg12[%c0_15, %c0_16] : memref<8x128xf32, #tpu.memory_space<vmem>>, vector<8x128xf32>
    tpu.vector_store %arg12[%c0_15, %c0_16], %15 {strides = array<i32>} : memref<8x128xf32, #tpu.memory_space<vmem>>, vector<8x128xf32>,
    %c0_i32_17 = arith.constant 0 : i32
    %17 = arith.cmpi eq, %arg2, %c0_i32_17 : i32
    %18 = arith.extui %17 : i1 to i32
    %c0_i32_18 = arith.constant 0 : i32
    %19 = arith.cmpi ne, %18, %c0_i32_18 : i32
    scf.if %19 {
      %c0_19 = arith.constant 0 : index
      %c0_20 = arith.constant 0 : index
      %20 = vector.load %arg7[%c0_19, %c0_20] : memref<1x128xf32, #tpu.memory_space<vmem>>, vector<1x128xf32>
      %c0_21 = arith.constant 0 : index
      %c0_22 = arith.constant 0 : index
      %21 = vector.load %arg8[%c0_21, %c0_22] : memref<1x128xf32, #tpu.memory_space<vmem>>, vector<1x128xf32>
      %c0_23 = arith.constant 0 : index
      %c0_24 = arith.constant 0 : index
      %22 = vector.load %arg9[%c0_23, %c0_24] : memref<1x128xf32, #tpu.memory_space<vmem>>, vector<1x128xf32>
      %23 = arith.mulf %22, %20 : vector<1x128xf32>
      %24 = arith.addf %21, %23 : vector<1x128xf32>
      %c0_25 = arith.constant 0 : index
      %c0_26 = arith.constant 0 : index
      %25 = vector.load %arg11[%c0_25, %c0_26] : memref<8x128xf32, #tpu.memory_space<vmem>>, vector<8x128xf32>
      %c0_27 = arith.constant 0 : index
      %c0_28 = arith.constant 0 : index
      %26 = vector.load %arg12[%c0_27, %c0_28] : memref<8x128xf32, #tpu.memory_space<vmem>>, vector<8x128xf32>
      %27 = vector.broadcast %20 : vector<1x128xf32> to vector<8x128xf32>
      %28 = arith.mulf %27, %26 : vector<8x128xf32>
      %29 = arith.addf %25, %28 : vector<8x128xf32>
      %30 = vector.broadcast %24 : vector<1x128xf32> to vector<8x128xf32>
      %31 = arith.addf %29, %30 : vector<8x128xf32>
      %c0_29 = arith.constant 0 : index
      %c0_30 = arith.constant 0 : index
      %32 = vector.load %arg10[%c0_29, %c0_30] : memref<8x128xf32, #tpu.memory_space<vmem>>, vector<8x128xf32>
      tpu.vector_store %arg10[%c0_29, %c0_30], %31 {strides = array<i32>} : memref<8x128xf32, #tpu.memory_space<vmem>>, vector<8x128xf32>,
    } else {
    }
    return
  }
  func.func @transform_0(%arg0: i32, %arg1: i32, %arg2: i32) -> (i32, i32) {
    %c0_i32 = arith.constant 0 : i32
    return %arg0, %arg2 : i32, i32
  }
  func.func @transform_1(%arg0: i32, %arg1: i32, %arg2: i32) -> (i32, i32) {
    %c0_i32 = arith.constant 0 : i32
    return %arg2, %arg1 : i32, i32
  }
  func.func @transform_2(%arg0: i32, %arg1: i32, %arg2: i32) -> (i32, i32) {
    %c0_i32 = arith.constant 0 : i32
    return %arg2, %arg1 : i32, i32
  }
  func.func @transform_3(%arg0: i32, %arg1: i32, %arg2: i32) -> (i32, i32) {
    %c0_i32 = arith.constant 0 : i32
    %c0_i32_0 = arith.constant 0 : i32
    return %c0_i32, %arg2 : i32, i32
  }
  func.func @transform_4(%arg0: i32, %arg1: i32, %arg2: i32) -> (i32, i32) {
    %c0_i32 = arith.constant 0 : i32
    %c0_i32_0 = arith.constant 0 : i32
    return %c0_i32, %arg1 : i32, i32
  }
  func.func @transform_5(%arg0: i32, %arg1: i32, %arg2: i32) -> (i32, i32) {
    %c0_i32 = arith.constant 0 : i32
    %c0_i32_0 = arith.constant 0 : i32
    return %c0_i32, %arg1 : i32, i32
  }
  func.func @transform_6(%arg0: i32, %arg1: i32, %arg2: i32) -> (i32, i32) {
    %c0_i32 = arith.constant 0 : i32
    %c0_i32_0 = arith.constant 0 : i32
    return %c0_i32, %arg1 : i32, i32
  }
  func.func @transform_7(%arg0: i32, %arg1: i32, %arg2: i32) -> (i32, i32) {
    %c0_i32 = arith.constant 0 : i32
    return %arg0, %arg1 : i32, i32
  }
}

</mosaic_0001>

<llo_original>
// kernel: tpu_custom_call.1
$region0: #{tpu_custom_call.1}
  #allocation0 [shape = 'u32[]', space=smem, size = 0x4, offset = 0x4, fixed_abs, tag = 'smem constant byte address 0x4 - core index']
  #allocation1 [shape = 'u32[144,128]{1,0:T(1,128)}', space=vmem, size = 0x12000, scoped, tag = 'internal scratch']
  #allocation2 [shape = 'f32[8,128]{1,0:T(8,128)}', space=vmem, size = 0x1000, scoped, tag = 'scratch operand']
  #allocation3 [shape = 'f32[8,128]{1,0:T(8,128)}', space=vmem, size = 0x1000, scoped, tag = 'scratch operand']
  %s0 = inlined_call_operand.hbm [shape: f32[8,128], index: 0, kind: input, shape index: {}]
  %s1 = inlined_call_operand.hbm [shape: f32[128,128], index: 1, kind: input, shape index: {}]
  %s2 = inlined_call_operand.hbm [shape: f32[128,128], index: 2, kind: input, shape index: {}]
  %s3 = inlined_call_operand.vmem [shape: f32[1,128], index: 3, kind: input, shape index: {}]
  %s4 = inlined_call_operand.vmem [shape: f32[1,128], index: 4, kind: input, shape index: {}]
  %s5 = inlined_call_operand.vmem [shape: f32[1,128], index: 5, kind: input, shape index: {}]
  %s6 = inlined_call_operand.vmem [shape: f32[1,128], index: 6, kind: input, shape index: {}]
  %s7 = inlined_call_operand.hbm [shape: f32[8,128], index: 7, kind: output, shape index: {}]
  %s8 = sld [smem:[#allocation0]]
  $region58: #{tpu_custom_call.1} parent=0
    _
  %s10 = ssub.s32 1, %s8
  %s11 = scalar_select 0, %s10, %s8
  $region1: #{tpu_custom_call.1} parent=0
    #allocation4 [shape = 'u8[4096]{0}', space=vmem, size = 0x1000, scoped, tag = 'input window, operand 0, single buffered']
    #allocation5 [shape = 's32[1]{0}', space=sflag, size = 0x4, scoped, tag = 'scoped memory for tpu_custom_call.1']
    #allocation6 [shape = 's32[1]{0}', space=sflag, size = 0x4, scoped, tag = 'scoped memory for tpu_custom_call.1']
    #allocation7 [shape = 'u8[65536]{0}', space=vmem, size = 0x10000, scoped, tag = 'input window, operand 1, single buffered']
    #allocation8 [shape = 's32[1]{0}', space=sflag, size = 0x4, scoped, tag = 'scoped memory for tpu_custom_call.1']
    #allocation9 [shape = 'u8[65536]{0}', space=vmem, size = 0x10000, scoped, tag = 'input window, operand 2, single buffered']
    #allocation10 [shape = 'u8[4096]{0}', space=vmem, size = 0x1000, scoped, tag = 'output window, operand 0, single buffered']
    %12 = vsyncpa [#allocation5], 0
    %13 = vsyncpa [#allocation8], 0
    %14 = vsyncpa [#allocation6], 0
    // Predicated region
    $region2: #{tpu_custom_call.1} parent=1 // pred_check
      _
    $region3: #{tpu_custom_call.1} parent=1 // pred_check_branch
      %16 = sbr.rel (0) target = $region5
    $region4: #{tpu_custom_call.1} parent=1 // pred_region
      %s18 = ssub.s32 128, 128
      %19 = vsyncadd [#allocation5], %s18
      %s21 = sshll.u32 [#allocation4], 4
      %s22 = int_to_ptr.vmem [resolvable:$true] %s21
      %24 = dma.hbm_to_vmem [thread:$0]  %s0, 128, %s22, [#allocation5]
    $region5: #{tpu_custom_call.1} parent=1 // pred_fallthru
      _
    // Predicated region
    $region6: #{tpu_custom_call.1} parent=1 // pred_check
      _
    $region7: #{tpu_custom_call.1} parent=1 // pred_check_branch
      %26 = sbr.rel (0) target = $region9
    $region8: #{tpu_custom_call.1} parent=1 // pred_region
      %s28 = ssub.s32 2048, 2048
      %29 = vsyncadd [#allocation8], %s28
      %s30 = sshll.u32 [#allocation7], 4
      %s31 = int_to_ptr.vmem [resolvable:$true] %s30
      %36 = dma.hbm_to_vmem [thread:$0]  %s1, 2048, %s31, [#allocation8], 128, 128, 8
    $region9: #{tpu_custom_call.1} parent=1 // pred_fallthru
      _
    // Predicated region
    $region10: #{tpu_custom_call.1} parent=1 // pred_check
      _
    $region11: #{tpu_custom_call.1} parent=1 // pred_check_branch
      %38 = sbr.rel (0) target = $region13
    $region12: #{tpu_custom_call.1} parent=1 // pred_region
      %s40 = ssub.s32 2048, 2048
      %41 = vsyncadd [#allocation8], %s40
      %s42 = sshll.u32 [#allocation9], 4
      %s43 = int_to_ptr.vmem [resolvable:$true] %s42
      %48 = dma.hbm_to_vmem [thread:$0]  %s2, 2048, %s43, [#allocation8], 128, 128, 8
    $region13: #{tpu_custom_call.1} parent=1 // pred_fallthru
      _
    // Predicated region
    $region14: #{tpu_custom_call.1} parent=1 // pred_check
      _
    $region15: #{tpu_custom_call.1} parent=1 // pred_check_branch
      %50 = sbr.rel (0) target = $region17
    $region16: #{tpu_custom_call.1} parent=1 // pred_region
      _
    $region17: #{tpu_custom_call.1} parent=1 // pred_fallthru
      _
    // Predicated region
    $region18: #{tpu_custom_call.1} parent=1 // pred_check
      _
    $region19: #{tpu_custom_call.1} parent=1 // pred_check_branch
      %52 = sbr.rel (0) target = $region21
    $region20: #{tpu_custom_call.1} parent=1 // pred_region
      _
    $region21: #{tpu_custom_call.1} parent=1 // pred_fallthru
      _
    // Predicated region
    $region22: #{tpu_custom_call.1} parent=1 // pred_check
      _
    $region23: #{tpu_custom_call.1} parent=1 // pred_check_branch
      %54 = sbr.rel (0) target = $region25
    $region24: #{tpu_custom_call.1} parent=1 // pred_region
      _
    $region25: #{tpu_custom_call.1} parent=1 // pred_fallthru
      _
    // Predicated region
    $region26: #{tpu_custom_call.1} parent=1 // pred_check
      _
    $region27: #{tpu_custom_call.1} parent=1 // pred_check_branch
      %56 = sbr.rel (0) target = $region29
    $region28: #{tpu_custom_call.1} parent=1 // pred_region
      _
    $region29: #{tpu_custom_call.1} parent=1 // pred_fallthru
      _
    // Predicated region
    $region30: #{tpu_custom_call.1} parent=1 // pred_check
      _
    $region31: #{tpu_custom_call.1} parent=1 // pred_check_branch
      %58 = sbr.rel (0) target = $region33
    $region32: #{tpu_custom_call.1} parent=1 // pred_region
      %59 = dma.done [#allocation5], 128
    $region33: #{tpu_custom_call.1} parent=1 // pred_fallthru
      _
    // Predicated region
    $region34: #{tpu_custom_call.1} parent=1 // pred_check
      _
    $region35: #{tpu_custom_call.1} parent=1 // pred_check_branch
      %61 = sbr.rel (0) target = $region37
    $region36: #{tpu_custom_call.1} parent=1 // pred_region
      %62 = dma.done [#allocation8], 2048
    $region37: #{tpu_custom_call.1} parent=1 // pred_fallthru
      _
    // Predicated region
    $region38: #{tpu_custom_call.1} parent=1 // pred_check
      _
    $region39: #{tpu_custom_call.1} parent=1 // pred_check_branch
      %64 = sbr.rel (0) target = $region41
    $region40: #{tpu_custom_call.1} parent=1 // pred_region
      %65 = dma.done [#allocation8], 2048
    $region41: #{tpu_custom_call.1} parent=1 // pred_fallthru
      _
    %p66 = scmp.eq.s32.totalorder 0, 0
    // Predicated region
    $region42: #{tpu_custom_call.1} parent=1 // pred_check
      %p67 = pneg %p66
    $region43: #{tpu_custom_call.1} parent=1 // pred_check_branch
      %69 = sbr.rel (%p67) target = $region45
    $region44: #{tpu_custom_call.1} parent=1 // pred_region
      %70 = vst [vmem:[#allocation2] sm:$0xff] 0.0
      %71 = vst [vmem:[#allocation3] sm:$0xff] 0.0
    $region45: #{tpu_custom_call.1} parent=1 // pred_fallthru
      _
    %v72 = vld [vmem:[#allocation4] sm:$0xff]
    %v73 = vld [vmem:[#allocation2] sm:$0xff]
    %v74 = vld [vmem:[#allocation7] sm:$0xff]
    %v75 = vld [vmem:[#allocation7 + $0x8] sm:$0xff]
    %v76 = vld [vmem:[#allocation7 + $0x10] sm:$0xff]
    %v77 = vld [vmem:[#allocation7 + $0x18] sm:$0xff]
    %v78 = vld [vmem:[#allocation7 + $0x20] sm:$0xff]
    %v79 = vld [vmem:[#allocation7 + $0x28] sm:$0xff]
    %v80 = vld [vmem:[#allocation7 + $0x30] sm:$0xff]
    %v81 = vld [vmem:[#allocation7 + $0x38] sm:$0xff]
    %v82 = vld [vmem:[#allocation7 + $0x40] sm:$0xff]
    %v83 = vld [vmem:[#allocation7 + $0x48] sm:$0xff]
    %v84 = vld [vmem:[#allocation7 + $0x50] sm:$0xff]
    %v85 = vld [vmem:[#allocation7 + $0x58] sm:$0xff]
    %v86 = vld [vmem:[#allocation7 + $0x60] sm:$0xff]
    %v87 = vld [vmem:[#allocation7 + $0x68] sm:$0xff]
    %v88 = vld [vmem:[#allocation7 + $0x70] sm:$0xff]
    %v89 = vld [vmem:[#allocation7 + $0x78] sm:$0xff]
    %90 = vmatprep.subr.mxu0 0.0
    %91 = vmatpush1.msra.mxu0 %v89
    %92 = vmatprep.subr.mxu0 0.0
    %93 = vmatpush1.msra.mxu0 %v88
    %94 = vmatprep.subr.mxu0 0.0
    %95 = vmatpush1.msra.mxu0 %v87
    %96 = vmatprep.subr.mxu0 0.0
    %97 = vmatpush1.msra.mxu0 %v86
    %98 = vmatprep.subr.mxu0 0.0
    %99 = vmatpush1.msra.mxu0 %v85
    %100 = vmatprep.subr.mxu0 0.0
    %101 = vmatpush1.msra.mxu0 %v84
    %102 = vmatprep.subr.mxu0 0.0
    %103 = vmatpush1.msra.mxu0 %v83
    %104 = vmatprep.subr.mxu0 0.0
    %105 = vmatpush1.msra.mxu0 %v82
    %106 = vmatprep.subr.mxu0 0.0
    %107 = vmatpush1.msra.mxu0 %v81
    %108 = vmatprep.subr.mxu0 0.0
    %109 = vmatpush1.msra.mxu0 %v80
    %110 = vmatprep.subr.mxu0 0.0
    %111 = vmatpush1.msra.mxu0 %v79
    %112 = vmatprep.subr.mxu0 0.0
    %113 = vmatpush1.msra.mxu0 %v78
    %114 = vmatprep.subr.mxu0 0.0
    %115 = vmatpush1.msra.mxu0 %v77
    %116 = vmatprep.subr.mxu0 0.0
    %117 = vmatpush1.msra.mxu0 %v76
    %118 = vmatprep.subr.mxu0 0.0
    %119 = vmatpush1.msra.mxu0 %v75
    %120 = vmatprep.subr.mxu0 0.0
    %121 = vmatpush1.msra.mxu0 %v74
    %122 = vmatprep.subr.mxu0 0.0
    %123 = vmatpush2.msra.mxu0 0.0
    %124 = vmatprep.subr.mxu0 0.0
    %125 = vmatpush2.msra.mxu0 0.0
    %126 = vmatprep.subr.mxu0 0.0
    %127 = vmatpush2.msra.mxu0 0.0
    %128 = vmatprep.subr.mxu0 0.0
    %129 = vmatpush2.msra.mxu0 0.0
    %130 = vmatprep.subr.mxu0 0.0
    %131 = vmatpush2.msra.mxu0 0.0
    %132 = vmatprep.subr.mxu0 0.0
    %133 = vmatpush2.msra.mxu0 0.0
    %134 = vmatprep.subr.mxu0 0.0
    %135 = vmatpush2.msra.mxu0 0.0
    %136 = vmatprep.subr.mxu0 0.0
    %137 = vmatpush2.msra.mxu0 0.0
    %138 = vmatprep.subr.mxu0 0.0
    %139 = vmatpush2.msra.mxu0 0.0
    %140 = vmatprep.subr.mxu0 0.0
    %141 = vmatpush2.msra.mxu0 0.0
    %142 = vmatprep.subr.mxu0 0.0
    %143 = vmatpush2.msra.mxu0 0.0
    %144 = vmatprep.subr.mxu0 0.0
    %145 = vmatpush2.msra.mxu0 0.0
    %146 = vmatprep.subr.mxu0 0.0
    %147 = vmatpush2.msra.mxu0 0.0
    %148 = vmatprep.subr.mxu0 0.0
    %149 = vmatpush2.msra.mxu0 0.0
    %150 = vmatprep.subr.mxu0 0.0
    %151 = vmatpush2.msra.mxu0 0.0
    %152 = vmatprep.subr.mxu0 0.0
    %153 = vmatpush2.msra.mxu0 0.0
    %154 = vmatprep.mubr.f32.mxu0 0.0
    %155 = vmatmul.mubr.f32.gmra.mxu0 %v72
    %v156 = vpop.f32.mrf.mxu0
    %v157 = vadd.f32 0.0, %v156
    %v158 = vpop.f32.mrf.mxu0
    %159 = vdwg.mxu0
    %v160 = vadd.f32 %v73, %v157
    %161 = vst [vmem:[#allocation2] sm:$0xff] %v160
    %v162 = vld [vmem:[%s3] sm:$0x1]
    %v164 = vlaneseq
    %v165 = vshrl.u32 %v164, 7
    %v166 = vsub.s32 0, %v165
    %v167 = vrot.slane %v162, %v166
    %v169 = vmul.f32 %v72, %v167
    %v170 = vld [vmem:[#allocation3] sm:$0xff]
    %v171 = vld [vmem:[#allocation9] sm:$0xff]
    %v172 = vld [vmem:[#allocation9 + $0x8] sm:$0xff]
    %v173 = vld [vmem:[#allocation9 + $0x10] sm:$0xff]
    %v174 = vld [vmem:[#allocation9 + $0x18] sm:$0xff]
    %v175 = vld [vmem:[#allocation9 + $0x20] sm:$0xff]
    %v176 = vld [vmem:[#allocation9 + $0x28] sm:$0xff]
    %v177 = vld [vmem:[#allocation9 + $0x30] sm:$0xff]
    %v178 = vld [vmem:[#allocation9 + $0x38] sm:$0xff]
    %v179 = vld [vmem:[#allocation9 + $0x40] sm:$0xff]
    %v180 = vld [vmem:[#allocation9 + $0x48] sm:$0xff]
    %v181 = vld [vmem:[#allocation9 + $0x50] sm:$0xff]
    %v182 = vld [vmem:[#allocation9 + $0x58] sm:$0xff]
    %v183 = vld [vmem:[#allocation9 + $0x60] sm:$0xff]
    %v184 = vld [vmem:[#allocation9 + $0x68] sm:$0xff]
    %v185 = vld [vmem:[#allocation9 + $0x70] sm:$0xff]
    %v186 = vld [vmem:[#allocation9 + $0x78] sm:$0xff]
    %187 = vmatprep.subr.mxu0 0.0
    %188 = vmatpush1.msra.mxu0 %v186
    %189 = vmatprep.subr.mxu0 0.0
    %190 = vmatpush1.msra.mxu0 %v185
    %191 = vmatprep.subr.mxu0 0.0
    %192 = vmatpush1.msra.mxu0 %v184
    %193 = vmatprep.subr.mxu0 0.0
    %194 = vmatpush1.msra.mxu0 %v183
    %195 = vmatprep.subr.mxu0 0.0
    %196 = vmatpush1.msra.mxu0 %v182
    %197 = vmatprep.subr.mxu0 0.0
    %198 = vmatpush1.msra.mxu0 %v181
    %199 = vmatprep.subr.mxu0 0.0
    %200 = vmatpush1.msra.mxu0 %v180
    %201 = vmatprep.subr.mxu0 0.0
    %202 = vmatpush1.msra.mxu0 %v179
    %203 = vmatprep.subr.mxu0 0.0
    %204 = vmatpush1.msra.mxu0 %v178
    %205 = vmatprep.subr.mxu0 0.0
    %206 = vmatpush1.msra.mxu0 %v177
    %207 = vmatprep.subr.mxu0 0.0
    %208 = vmatpush1.msra.mxu0 %v176
    %209 = vmatprep.subr.mxu0 0.0
    %210 = vmatpush1.msra.mxu0 %v175
    %211 = vmatprep.subr.mxu0 0.0
    %212 = vmatpush1.msra.mxu0 %v174
    %213 = vmatprep.subr.mxu0 0.0
    %214 = vmatpush1.msra.mxu0 %v173
    %215 = vmatprep.subr.mxu0 0.0
    %216 = vmatpush1.msra.mxu0 %v172
    %217 = vmatprep.subr.mxu0 0.0
    %218 = vmatpush1.msra.mxu0 %v171
    %219 = vmatprep.subr.mxu0 0.0
    %220 = vmatpush2.msra.mxu0 0.0
    %221 = vmatprep.subr.mxu0 0.0
    %222 = vmatpush2.msra.mxu0 0.0
    %223 = vmatprep.subr.mxu0 0.0
    %224 = vmatpush2.msra.mxu0 0.0
    %225 = vmatprep.subr.mxu0 0.0
    %226 = vmatpush2.msra.mxu0 0.0
    %227 = vmatprep.subr.mxu0 0.0
    %228 = vmatpush2.msra.mxu0 0.0
    %229 = vmatprep.subr.mxu0 0.0
    %230 = vmatpush2.msra.mxu0 0.0
    %231 = vmatprep.subr.mxu0 0.0
    %232 = vmatpush2.msra.mxu0 0.0
    %233 = vmatprep.subr.mxu0 0.0
    %234 = vmatpush2.msra.mxu0 0.0
    %235 = vmatprep.subr.mxu0 0.0
    %236 = vmatpush2.msra.mxu0 0.0
    %237 = vmatprep.subr.mxu0 0.0
    %238 = vmatpush2.msra.mxu0 0.0
    %239 = vmatprep.subr.mxu0 0.0
    %240 = vmatpush2.msra.mxu0 0.0
    %241 = vmatprep.subr.mxu0 0.0
    %242 = vmatpush2.msra.mxu0 0.0
    %243 = vmatprep.subr.mxu0 0.0
    %244 = vmatpush2.msra.mxu0 0.0
    %245 = vmatprep.subr.mxu0 0.0
    %246 = vmatpush2.msra.mxu0 0.0
    %247 = vmatprep.subr.mxu0 0.0
    %248 = vmatpush2.msra.mxu0 0.0
    %249 = vmatprep.subr.mxu0 0.0
    %250 = vmatpush2.msra.mxu0 0.0
    %251 = vmatprep.mubr.f32.mxu0 0.0
    %252 = vmatmul.mubr.f32.gmra.mxu0 %v169
    %v253 = vpop.f32.mrf.mxu0
    %v254 = vadd.f32 0.0, %v253
    %v255 = vpop.f32.mrf.mxu0
    %256 = vdwg.mxu0
    %v257 = vadd.f32 %v170, %v254
    %258 = vst [vmem:[#allocation3] sm:$0xff] %v257
    // Predicated region
    $region46: #{tpu_custom_call.1} parent=1 // pred_check
      %p259 = pneg %p66
    $region47: #{tpu_custom_call.1} parent=1 // pred_check_branch
      %261 = sbr.rel (%p259) target = $region49
    $region48: #{tpu_custom_call.1} parent=1 // pred_region
      %v262 = vld [vmem:[%s4] sm:$0x1]
      %v263 = vld [vmem:[%s5] sm:$0x1]
      %v264 = vld [vmem:[%s6] sm:$0x1]
      %v265 = vmul.f32 %v264, %v262
      %v266 = vadd.f32 %v263, %v265
      %v267 = vld [vmem:[#allocation2] sm:$0xff]
      %v268 = vld [vmem:[#allocation3] sm:$0xff]
      %v270 = vlaneseq
      %v271 = vshrl.u32 %v270, 7
      %v272 = vsub.s32 0, %v271
      %v273 = vrot.slane %v262, %v272
      %v275 = vmul.f32 %v273, %v268
      %v276 = vadd.f32 %v267, %v275
      %v278 = vlaneseq
      %v279 = vshrl.u32 %v278, 7
      %v280 = vsub.s32 0, %v279
      %v281 = vrot.slane %v266, %v280
      %v283 = vadd.f32 %v276, %v281
      %284 = vst [vmem:[#allocation10] sm:$0xff] %v283
    $region49: #{tpu_custom_call.1} parent=1 // pred_fallthru
      _
    // Predicated region
    $region50: #{tpu_custom_call.1} parent=1 // pred_check
      _
    $region51: #{tpu_custom_call.1} parent=1 // pred_check_branch
      %286 = sbr.rel (0) target = $region53
    $region52: #{tpu_custom_call.1} parent=1 // pred_region
      %s288 = ssub.s32 128, 128
      %289 = vsyncadd [#allocation6], %s288
      %s291 = sshll.u32 [#allocation10], 4
      %s292 = int_to_ptr.vmem [resolvable:$true] %s291
      %294 = dma.vmem_to_hbm [thread:$0]  %s292, 128, %s7, [#allocation6]
    $region53: #{tpu_custom_call.1} parent=1 // pred_fallthru
      _
    // Predicated region
    $region54: #{tpu_custom_call.1} parent=1 // pred_check
      _
    $region55: #{tpu_custom_call.1} parent=1 // pred_check_branch
      %296 = sbr.rel (0) target = $region57
    $region56: #{tpu_custom_call.1} parent=1 // pred_region
      %297 = dma.done [#allocation6], 128
    $region57: #{tpu_custom_call.1} parent=1 // pred_fallthru
      _
    %298 = vsyncpa [#allocation5], 1
    %299 = vsyncpa [#allocation8], 1
    %300 = vsyncpa [#allocation6], 1

</llo_original>
